<compile_context>
chip_gen: v7x
topology: tpu7x:2x2x1
jax: 0.10.0
libtpu: 0.0.40
codegen_flags: <defaults>
</compile_context>

<pallas_src>
import jax
import jax.numpy as jnp
from jax import lax
from jax.experimental import pallas as pl
from jax.experimental.pallas import tpu as pltpu


def _round_up(x, m):
    return ((x + m - 1) // m) * m


# ---------------------------------------------------------------------------
# Tiny-batch path: one block, weight kept in native (N, K) lane-dense layout
# (avoids padding the 10-wide weight output dim up to 128 lanes for the DMA).
# ---------------------------------------------------------------------------
def _logreg_small_kernel(x_ref, w_ref, b_ref, o_ref):
    # x: (M, K), w: (N, K), b: (1, N)  ->  o = x @ w.T + b  (contract over K).
    acc = lax.dot_general(
        x_ref[...],
        w_ref[...],
        dimension_numbers=(((1,), (1,)), ((), ())),
        preferred_element_type=jnp.float32,
    )
    o_ref[...] = (acc + b_ref[...]).astype(o_ref.dtype)


def _logreg_small(x2d, weight, bias):
    M, K = x2d.shape
    N = weight.shape[0]
    out_dtype = x2d.dtype

    # Pad batch to one sublane group (>= 8 rows); slice back afterwards.
    Mp = max(_round_up(M, 8), 8)
    if Mp != M:
        x2d = jnp.pad(x2d, ((0, Mp - M), (0, 0)))

    w = weight.astype(x2d.dtype)
    b2d = bias.astype(jnp.float32).reshape(1, N)

    out = pl.pallas_call(
        _logreg_small_kernel,
        out_shape=jax.ShapeDtypeStruct((Mp, N), out_dtype),
        grid_spec=pltpu.PrefetchScalarGridSpec(
            num_scalar_prefetch=0,
            grid=(1,),
            in_specs=[
                pl.BlockSpec((Mp, K), lambda i: (0, 0)),
                pl.BlockSpec((N, K), lambda i: (0, 0)),   # native (N, K): lane-dense
                pl.BlockSpec((1, N), lambda i: (0, 0)),
            ],
            out_specs=pl.BlockSpec((Mp, N), lambda i: (0, 0)),
        ),
        compiler_params=pltpu.CompilerParams(
            dimension_semantics=("arbitrary",),
        ),
        cost_estimate=pl.CostEstimate(
            flops=2 * Mp * K * N,
            transcendentals=0,
            bytes_accessed=int(
                x2d.dtype.itemsize * Mp * K
                + w.dtype.itemsize * N * K
                + 4 * N
                + jnp.dtype(out_dtype).itemsize * Mp * N
            ),
        ),
    )(x2d, w, b2d)
    return out[:M]


# ---------------------------------------------------------------------------
# Tiled path: grid over M only, full-K tiles, VMEM-resident (K, N) weight.
# ---------------------------------------------------------------------------
def _logreg_tiled_kernel(x_ref, w_ref, b_ref, o_ref):
    acc = jnp.dot(x_ref[...], w_ref[...], preferred_element_type=jnp.float32)
    # Epilogue (bias add) stays in f32; cast once at the store.
    o_ref[...] = (acc + b_ref[...]).astype(o_ref.dtype)


def _pick_tm(M, tm_max=512):
    """Big tiles for HBM roofline, but keep >=4 row tiles when the batch allows
    so v7x's two TensorCores both get work on the 'parallel' axis."""
    Mp = max(_round_up(M, 128), 128)
    tm = min(tm_max, Mp)
    while tm > 128 and Mp // tm < 4:
        tm //= 2
    return tm


def _logreg_tiled(x2d, weight, bias, *, tm=None):
    M, K = x2d.shape
    N = weight.shape[0]
    out_dtype = x2d.dtype

    if tm is None:
        tm = _pick_tm(M)

    Mp = _round_up(M, tm)
    Np = _round_up(N, 128)   # lane-dense output -> unmasked 128-lane stores
    Kp = _round_up(K, 128)

    xp = x2d if (Mp, Kp) == (M, K) else jnp.pad(x2d, ((0, Mp - M), (0, Kp - K)))

    # Pre-transpose the (tiny) weight once in the wrapper to (K, N): the MXU
    # then sees a plain (M,K)x(K,N) contraction (no in-kernel vxpose), and the
    # padded weight block (Kp, Np) is fetched into VMEM exactly once below.
    wT = jnp.transpose(weight).astype(x2d.dtype)
    wp = wT if (Kp, Np) == (K, N) else jnp.pad(wT, ((0, Kp - K), (0, Np - N)))
    bp = bias.astype(jnp.float32)
    bp = (bp if Np == N else jnp.pad(bp, (0, Np - N))).reshape(1, Np)

    out = pl.pallas_call(
        _logreg_tiled_kernel,
        out_shape=jax.ShapeDtypeStruct((Mp, Np), out_dtype),
        grid_spec=pltpu.PrefetchScalarGridSpec(
            num_scalar_prefetch=0,
            grid=(Mp // tm,),
            in_specs=[
                pl.BlockSpec((tm, Kp), lambda i: (i, 0)),
                pl.BlockSpec((Kp, Np), lambda i: (0, 0)),  # VMEM-resident weight
                pl.BlockSpec((1, Np), lambda i: (0, 0)),
            ],
            out_specs=pl.BlockSpec((tm, Np), lambda i: (i, 0)),
        ),
        compiler_params=pltpu.CompilerParams(
            dimension_semantics=("parallel",),
        ),
        cost_estimate=pl.CostEstimate(
            flops=2 * Mp * Kp * Np,
            transcendentals=0,
            bytes_accessed=int(
                xp.dtype.itemsize * Mp * Kp
                + wp.dtype.itemsize * Kp * Np        # fetched once (resident)
                + 4 * Np
                + jnp.dtype(out_dtype).itemsize * Mp * Np
            ),
        ),
    )(xp, wp, bp)
    return out[:M, :N]


# ---------------------------------------------------------------------------
# Public forward: LogReg.forward(x) = x.view(-1, in_dim) @ W.T + b
# ---------------------------------------------------------------------------
def logreg_forward(x, weight, bias):
    input_dim = weight.shape[1]
    N = weight.shape[0]

    # == torch .view(-1, input_dim); caller dtype flows through (bf16 inputs
    # keep bf16 HBM reads; no forced f32 pass over x).
    x2d = x.reshape(-1, input_dim)
    M, K = x2d.shape

    # Single-block only for tiny problems (few hundred KiB); everything else
    # takes the pipelined, weight-resident tiled path.
    Mp = max(_round_up(M, 8), 8)
    small_bytes = x2d.dtype.itemsize * (Mp * K + N * K + Mp * N)
    if M <= 128 and small_bytes <= (512 << 10):
        return _logreg_small(x2d, weight, bias)
    return _logreg_tiled(x2d, weight, bias)


def init_logreg_params(key, input_dim, output_dim):
    """Deterministic init mimicking nn.Linear's default (uniform +/- 1/sqrt(in))."""
    kw, kb = jax.random.split(key)
    bound = 1.0 / jnp.sqrt(jnp.float32(input_dim))
    weight = jax.random.uniform(
        kw, (output_dim, input_dim), jnp.float32, minval=-bound, maxval=bound
    )
    bias = jax.random.uniform(
        kb, (output_dim,), jnp.float32, minval=-bound, maxval=bound
    )
    return weight, bias


if __name__ == "__main__":
    key = jax.random.PRNGKey(0)
    kx, kp, kx2 = jax.random.split(key, 3)

    # Small NCHW input consistent with a vision pipeline feeding LogReg:
    # batch=2, channels=4, spatial=16x16 -> input_dim = 4*16*16 = 1024
    B, C, H, W = 2, 4, 16, 16
    input_dim = C * H * W
    output_dim = 10

    x = jax.random.normal(kx, (B, C, H, W), jnp.float32)
    weight, bias = init_logreg_params(kp, input_dim, output_dim)

    # --- tiny-batch / single-block path ---
    y = logreg_forward(x, weight, bias)
    jax.block_until_ready(y)
    y_ref = x.reshape(-1, input_dim) @ weight.T + bias
    assert y.shape == (B, output_dim)
    assert jnp.allclose(y, y_ref, atol=1e-5, rtol=1e-5)

    # --- tiled, weight-resident path (larger batch) ---
    Bt = 256
    x_big = jax.random.normal(kx2, (Bt, C, H, W), jnp.float32)
    y_t = logreg_forward(x_big, weight, bias)
    jax.block_until_ready(y_t)
    y_t_ref = x_big.reshape(-1, input_dim) @ weight.T + bias
    assert y_t.shape == (Bt, output_dim)
    assert jnp.allclose(y_t, y_t_ref, atol=1e-4, rtol=1e-4)

    print("KERNEL_OK")
</pallas_src>

<mosaic_0001>
module attributes {stable_mosaic.version = 11 : i64} {
  func.func @_logreg_small_kernel(%arg0: i32, %arg1: memref<8x1024xf32, #tpu.memory_space<vmem>>, %arg2: memref<10x1024xf32, #tpu.memory_space<vmem>>, %arg3: memref<1x10xf32, #tpu.memory_space<vmem>>, %arg4: memref<8x10xf32, #tpu.memory_space<vmem>>) attributes {dimension_semantics = [#tpu.dimension_semantics<arbitrary>], iteration_bounds = array<i64: 1>, scalar_prefetch = 0 : i64, scratch_operands = 0 : i64, tpu.core_type = #tpu.core_type<tc>, window_params = [{pipeline_mode = #tpu.pipeline_mode<synchronous>, transform_indices = @transform_0, window_bounds = array<i64: 8, 1024>}, {pipeline_mode = #tpu.pipeline_mode<synchronous>, transform_indices = @transform_1, window_bounds = array<i64: 10, 1024>}, {pipeline_mode = #tpu.pipeline_mode<synchronous>, transform_indices = @transform_2, window_bounds = array<i64: 1, 10>}, {pipeline_mode = #tpu.pipeline_mode<synchronous>, transform_indices = @transform_3, window_bounds = array<i64: 8, 10>}]} {
    %c0 = arith.constant 0 : index
    %c0_0 = arith.constant 0 : index
    %0 = vector.load %arg1[%c0, %c0_0] : memref<8x1024xf32, #tpu.memory_space<vmem>>, vector<8x1024xf32>
    %c0_1 = arith.constant 0 : index
    %c0_2 = arith.constant 0 : index
    %1 = vector.load %arg2[%c0_1, %c0_2] : memref<10x1024xf32, #tpu.memory_space<vmem>>, vector<10x1024xf32>
    %cst = arith.constant dense<0.000000e+00> : vector<8x10xf32>
    %2 = tpu.matmul %0, %1, %cst {dimension_numbers = #tpu.dot_dimension_numbers<[1], [1], [0], [0], [0, 0, 1, 0], [], []>} : vector<8x1024xf32>, vector<10x1024xf32>, vector<8x10xf32> -> vector<8x10xf32>
    %c0_3 = arith.constant 0 : index
    %c0_4 = arith.constant 0 : index
    %3 = vector.load %arg3[%c0_3, %c0_4] : memref<1x10xf32, #tpu.memory_space<vmem>>, vector<1x10xf32>
    %4 = vector.broadcast %3 : vector<1x10xf32> to vector<8x10xf32>
    %5 = arith.addf %2, %4 : vector<8x10xf32>
    %c0_5 = arith.constant 0 : index
    %c0_6 = arith.constant 0 : index
    %6 = vector.load %arg4[%c0_5, %c0_6] : memref<8x10xf32, #tpu.memory_space<vmem>>, vector<8x10xf32>
    tpu.vector_store %arg4[%c0_5, %c0_6], %5 {strides = array<i32>} : memref<8x10xf32, #tpu.memory_space<vmem>>, vector<8x10xf32>,
    return
  }
  func.func @transform_0(%arg0: i32) -> (i32, i32) {
    %c0_i32 = arith.constant 0 : i32
    %c0_i32_0 = arith.constant 0 : i32
    %c0_i32_1 = arith.constant 0 : i32
    return %c0_i32, %c0_i32_0 : i32, i32
  }
  func.func @transform_1(%arg0: i32) -> (i32, i32) {
    %c0_i32 = arith.constant 0 : i32
    %c0_i32_0 = arith.constant 0 : i32
    %c0_i32_1 = arith.constant 0 : i32
    return %c0_i32, %c0_i32_0 : i32, i32
  }
  func.func @transform_2(%arg0: i32) -> (i32, i32) {
    %c0_i32 = arith.constant 0 : i32
    %c0_i32_0 = arith.constant 0 : i32
    %c0_i32_1 = arith.constant 0 : i32
    return %c0_i32, %c0_i32_0 : i32, i32
  }
  func.func @transform_3(%arg0: i32) -> (i32, i32) {
    %c0_i32 = arith.constant 0 : i32
    %c0_i32_0 = arith.constant 0 : i32
    %c0_i32_1 = arith.constant 0 : i32
    return %c0_i32, %c0_i32_0 : i32, i32
  }
}

</mosaic_0001>

<llo_original>
// kernel: tpu_custom_call.1
$region0: #{tpu_custom_call.1}
  #allocation0 [shape = 'u32[]', space=smem, size = 0x4, offset = 0x4, fixed_abs, tag = 'smem constant byte address 0x4 - core index']
  #allocation1 [shape = 'u32[144,128]{1,0:T(1,128)}', space=vmem, size = 0x12000, scoped, tag = 'internal scratch']
  %s0 = inlined_call_operand.hbm [shape: f32[8,1024], index: 0, kind: input, shape index: {}]
  %s1 = inlined_call_operand.hbm [shape: f32[10,1024], index: 1, kind: input, shape index: {}]
  %s2 = inlined_call_operand.vmem [shape: f32[1,10], index: 2, kind: input, shape index: {}]
  %s3 = inlined_call_operand.hbm [shape: f32[8,10], index: 3, kind: output, shape index: {}]
  %s4 = sld [smem:[#allocation0]]
  $region30: #{tpu_custom_call.1} parent=0
    _
  %s6 = ssub.s32 1, %s4
  %s7 = scalar_select 0, %s6, %s4
  $region1: #{tpu_custom_call.1} parent=0
    #allocation2 [shape = 'u8[32768]{0}', space=vmem, size = 0x8000, scoped, tag = 'input window, operand 0, single buffered']
    #allocation3 [shape = 's32[1]{0}', space=sflag, size = 0x4, scoped, tag = 'scoped memory for tpu_custom_call.1']
    #allocation4 [shape = 's32[1]{0}', space=sflag, size = 0x4, scoped, tag = 'scoped memory for tpu_custom_call.1']
    #allocation5 [shape = 'u8[65536]{0}', space=vmem, size = 0x10000, scoped, tag = 'input window, operand 1, single buffered']
    #allocation6 [shape = 's32[1]{0}', space=sflag, size = 0x4, scoped, tag = 'scoped memory for tpu_custom_call.1']
    #allocation7 [shape = 'u8[4096]{0}', space=vmem, size = 0x1000, scoped, tag = 'output window, operand 0, single buffered']
    %8 = vsyncpa [#allocation3], 0
    %9 = vsyncpa [#allocation6], 0
    %10 = vsyncpa [#allocation4], 0
    // Predicated region
    $region2: #{tpu_custom_call.1} parent=1 // pred_check
      _
    $region3: #{tpu_custom_call.1} parent=1 // pred_check_branch
      %12 = sbr.rel (0) target = $region5
    $region4: #{tpu_custom_call.1} parent=1 // pred_region
      %s14 = ssub.s32 1024, 1024
      %15 = vsyncadd [#allocation3], %s14
      %s17 = sshll.u32 [#allocation2], 4
      %s18 = int_to_ptr.vmem [resolvable:$true] %s17
      %20 = dma.hbm_to_vmem [thread:$0]  %s0, 1024, %s18, [#allocation3]
    $region5: #{tpu_custom_call.1} parent=1 // pred_fallthru
      _
    // Predicated region
    $region6: #{tpu_custom_call.1} parent=1 // pred_check
      _
    $region7: #{tpu_custom_call.1} parent=1 // pred_check_branch
      %22 = sbr.rel (0) target = $region9
    $region8: #{tpu_custom_call.1} parent=1 // pred_region
      %s24 = ssub.s32 2048, 2048
      %25 = vsyncadd [#allocation6], %s24
      %s26 = sshll.u32 [#allocation5], 4
      %s27 = int_to_ptr.vmem [resolvable:$true] %s26
      %32 = dma.hbm_to_vmem [thread:$0]  %s1, 2048, %s27, [#allocation6], 1024, 1024, 64
    $region9: #{tpu_custom_call.1} parent=1 // pred_fallthru
      _
    // Predicated region
    $region10: #{tpu_custom_call.1} parent=1 // pred_check
      _
    $region11: #{tpu_custom_call.1} parent=1 // pred_check_branch
      %34 = sbr.rel (0) target = $region13
    $region12: #{tpu_custom_call.1} parent=1 // pred_region
      _
    $region13: #{tpu_custom_call.1} parent=1 // pred_fallthru
      _
    // Predicated region
    $region14: #{tpu_custom_call.1} parent=1 // pred_check
      _
    $region15: #{tpu_custom_call.1} parent=1 // pred_check_branch
      %36 = sbr.rel (0) target = $region17
    $region16: #{tpu_custom_call.1} parent=1 // pred_region
      %37 = dma.done [#allocation3], 1024
    $region17: #{tpu_custom_call.1} parent=1 // pred_fallthru
      _
    // Predicated region
    $region18: #{tpu_custom_call.1} parent=1 // pred_check
      _
    $region19: #{tpu_custom_call.1} parent=1 // pred_check_branch
      %39 = sbr.rel (0) target = $region21
    $region20: #{tpu_custom_call.1} parent=1 // pred_region
      %40 = dma.done [#allocation6], 2048
    $region21: #{tpu_custom_call.1} parent=1 // pred_fallthru
      _
    %v41 = vld [vmem:[#allocation2] sm:$0xff]
    %v42 = vld [vmem:[#allocation2 + $0x8] sm:$0xff]
    %v43 = vld [vmem:[#allocation2 + $0x10] sm:$0xff]
    %v44 = vld [vmem:[#allocation2 + $0x18] sm:$0xff]
    %v45 = vld [vmem:[#allocation2 + $0x20] sm:$0xff]
    %v46 = vld [vmem:[#allocation2 + $0x28] sm:$0xff]
    %v47 = vld [vmem:[#allocation2 + $0x30] sm:$0xff]
    %v48 = vld [vmem:[#allocation2 + $0x38] sm:$0xff]
    %v49 = vld [vmem:[#allocation5] sm:$0xff]
    %v50 = vld [vmem:[#allocation5 + $0x8] sm:$0xff]
    %v51 = vld [vmem:[#allocation5 + $0x10] sm:$0xff]
    %v52 = vld [vmem:[#allocation5 + $0x18] sm:$0xff]
    %v53 = vld [vmem:[#allocation5 + $0x20] sm:$0xff]
    %v54 = vld [vmem:[#allocation5 + $0x28] sm:$0xff]
    %v55 = vld [vmem:[#allocation5 + $0x30] sm:$0xff]
    %v56 = vld [vmem:[#allocation5 + $0x38] sm:$0xff]
    %v57 = vld [vmem:[#allocation5 + $0x40] sm:$0x3]
    %v58 = vld [vmem:[#allocation5 + $0x48] sm:$0x3]
    %v59 = vld [vmem:[#allocation5 + $0x50] sm:$0x3]
    %v60 = vld [vmem:[#allocation5 + $0x58] sm:$0x3]
    %v61 = vld [vmem:[#allocation5 + $0x60] sm:$0x3]
    %v62 = vld [vmem:[#allocation5 + $0x68] sm:$0x3]
    %v63 = vld [vmem:[#allocation5 + $0x70] sm:$0x3]
    %v64 = vld [vmem:[#allocation5 + $0x78] sm:$0x3]
    %v65 = vld [vmem:[%s2] sm:$0x1]
    %v67 = vlaneseq
    %v68 = vshrl.u32 %v67, 7
    %v69 = vsub.s32 0, %v68
    %v70 = vrot.slane %v65, %v69
    %72 = vmatprep.subr.mxu0 %v50
    %73 = vmatpush1.xpose.msra.mxu0 %v49
    %74 = vmatprep.subr.mxu0 %v58
    %75 = vmatpush1.xpose.msra.mxu0 %v57
    %76 = vmatprep.subr.mxu0 0.0
    %77 = vmatpush1.xpose.msra.mxu0 0.0
    %78 = vmatprep.subr.mxu0 0.0
    %79 = vmatpush1.xpose.msra.mxu0 0.0
    %80 = vmatprep.subr.mxu0 0.0
    %81 = vmatpush1.xpose.msra.mxu0 0.0
    %82 = vmatprep.subr.mxu0 0.0
    %83 = vmatpush1.xpose.msra.mxu0 0.0
    %84 = vmatprep.subr.mxu0 0.0
    %85 = vmatpush1.xpose.msra.mxu0 0.0
    %86 = vmatprep.subr.mxu0 0.0
    %87 = vmatpush1.xpose.msra.mxu0 0.0
    %88 = vmatprep.subr.mxu0 0.0
    %89 = vmatpush1.xpose.msra.mxu0 0.0
    %90 = vmatprep.subr.mxu0 0.0
    %91 = vmatpush1.xpose.msra.mxu0 0.0
    %92 = vmatprep.subr.mxu0 0.0
    %93 = vmatpush1.xpose.msra.mxu0 0.0
    %94 = vmatprep.subr.mxu0 0.0
    %95 = vmatpush1.xpose.msra.mxu0 0.0
    %96 = vmatprep.subr.mxu0 0.0
    %97 = vmatpush1.xpose.msra.mxu0 0.0
    %98 = vmatprep.subr.mxu0 0.0
    %99 = vmatpush1.xpose.msra.mxu0 0.0
    %100 = vmatprep.subr.mxu0 0.0
    %101 = vmatpush1.xpose.msra.mxu0 0.0
    %102 = vmatprep.subr.mxu0 0.0
    %103 = vmatpush1.xpose.msra.mxu0 0.0
    %104 = vmatprep.subr.mxu0 0.0
    %105 = vmatpush1.xpose.msra.mxu0 0.0
    %106 = vmatprep.subr.mxu0 0.0
    %107 = vmatpush1.xpose.msra.mxu0 0.0
    %108 = vmatprep.subr.mxu0 0.0
    %109 = vmatpush1.xpose.msra.mxu0 0.0
    %110 = vmatprep.subr.mxu0 0.0
    %111 = vmatpush1.xpose.msra.mxu0 0.0
    %112 = vmatprep.subr.mxu0 0.0
    %113 = vmatpush1.xpose.msra.mxu0 0.0
    %114 = vmatprep.subr.mxu0 0.0
    %115 = vmatpush1.xpose.msra.mxu0 0.0
    %116 = vmatprep.subr.mxu0 0.0
    %117 = vmatpush1.xpose.msra.mxu0 0.0
    %118 = vmatprep.subr.mxu0 0.0
    %119 = vmatpush1.xpose.msra.mxu0 0.0
    %120 = vmatprep.subr.mxu0 0.0
    %121 = vmatpush1.xpose.msra.mxu0 0.0
    %122 = vmatprep.subr.mxu0 0.0
    %123 = vmatpush1.xpose.msra.mxu0 0.0
    %124 = vmatprep.subr.mxu0 0.0
    %125 = vmatpush1.xpose.msra.mxu0 0.0
    %126 = vmatprep.subr.mxu0 0.0
    %127 = vmatpush1.xpose.msra.mxu0 0.0
    %128 = vmatprep.subr.mxu0 0.0
    %129 = vmatpush1.xpose.msra.mxu0 0.0
    %130 = vmatprep.subr.mxu0 0.0
    %131 = vmatpush1.xpose.msra.mxu0 0.0
    %132 = vmatprep.subr.mxu0 0.0
    %133 = vmatpush1.xpose.msra.mxu0 0.0
    %134 = vmatprep.subr.mxu0 0.0
    %135 = vmatpush1.xpose.msra.mxu0 0.0
    %136 = vmatprep.mubr.f32.mxu0 %v42
    %137 = vmatmul.mubr.f32.gmra.mrb[0].mxu0 %v41
    %v138 = vpop.f32.mrb[0].mxu0
    %v139 = vadd.f32 %v70, %v138
    %v140 = vpop.f32.mrb[0].mxu0
    %141 = vdwg.mxu0
    %142 = vmatprep.subr.mxu0 %v52
    %143 = vmatpush1.xpose.msra.mxu0 %v51
    %144 = vmatprep.subr.mxu0 %v60
    %145 = vmatpush1.xpose.msra.mxu0 %v59
    %146 = vmatprep.subr.mxu0 0.0
    %147 = vmatpush1.xpose.msra.mxu0 0.0
    %148 = vmatprep.subr.mxu0 0.0
    %149 = vmatpush1.xpose.msra.mxu0 0.0
    %150 = vmatprep.subr.mxu0 0.0
    %151 = vmatpush1.xpose.msra.mxu0 0.0
    %152 = vmatprep.subr.mxu0 0.0
    %153 = vmatpush1.xpose.msra.mxu0 0.0
    %154 = vmatprep.subr.mxu0 0.0
    %155 = vmatpush1.xpose.msra.mxu0 0.0
    %156 = vmatprep.subr.mxu0 0.0
    %157 = vmatpush1.xpose.msra.mxu0 0.0
    %158 = vmatprep.subr.mxu0 0.0
    %159 = vmatpush1.xpose.msra.mxu0 0.0
    %160 = vmatprep.subr.mxu0 0.0
    %161 = vmatpush1.xpose.msra.mxu0 0.0
    %162 = vmatprep.subr.mxu0 0.0
    %163 = vmatpush1.xpose.msra.mxu0 0.0
    %164 = vmatprep.subr.mxu0 0.0
    %165 = vmatpush1.xpose.msra.mxu0 0.0
    %166 = vmatprep.subr.mxu0 0.0
    %167 = vmatpush1.xpose.msra.mxu0 0.0
    %168 = vmatprep.subr.mxu0 0.0
    %169 = vmatpush1.xpose.msra.mxu0 0.0
    %170 = vmatprep.subr.mxu0 0.0
    %171 = vmatpush1.xpose.msra.mxu0 0.0
    %172 = vmatprep.subr.mxu0 0.0
    %173 = vmatpush1.xpose.msra.mxu0 0.0
    %174 = vmatprep.subr.mxu0 0.0
    %175 = vmatpush1.xpose.msra.mxu0 0.0
    %176 = vmatprep.subr.mxu0 0.0
    %177 = vmatpush1.xpose.msra.mxu0 0.0
    %178 = vmatprep.subr.mxu0 0.0
    %179 = vmatpush1.xpose.msra.mxu0 0.0
    %180 = vmatprep.subr.mxu0 0.0
    %181 = vmatpush1.xpose.msra.mxu0 0.0
    %182 = vmatprep.subr.mxu0 0.0
    %183 = vmatpush1.xpose.msra.mxu0 0.0
    %184 = vmatprep.subr.mxu0 0.0
    %185 = vmatpush1.xpose.msra.mxu0 0.0
    %186 = vmatprep.subr.mxu0 0.0
    %187 = vmatpush1.xpose.msra.mxu0 0.0
    %188 = vmatprep.subr.mxu0 0.0
    %189 = vmatpush1.xpose.msra.mxu0 0.0
    %190 = vmatprep.subr.mxu0 0.0
    %191 = vmatpush1.xpose.msra.mxu0 0.0
    %192 = vmatprep.subr.mxu0 0.0
    %193 = vmatpush1.xpose.msra.mxu0 0.0
    %194 = vmatprep.subr.mxu0 0.0
    %195 = vmatpush1.xpose.msra.mxu0 0.0
    %196 = vmatprep.subr.mxu0 0.0
    %197 = vmatpush1.xpose.msra.mxu0 0.0
    %198 = vmatprep.subr.mxu0 0.0
    %199 = vmatpush1.xpose.msra.mxu0 0.0
    %200 = vmatprep.subr.mxu0 0.0
    %201 = vmatpush1.xpose.msra.mxu0 0.0
    %202 = vmatprep.subr.mxu0 0.0
    %203 = vmatpush1.xpose.msra.mxu0 0.0
    %204 = vmatprep.subr.mxu0 0.0
    %205 = vmatpush1.xpose.msra.mxu0 0.0
    %206 = vmatprep.mubr.f32.mxu0 %v44
    %207 = vmatmul.mubr.f32.gmra.mrb[0].mxu0 %v43
    %v208 = vpop.f32.mrb[0].mxu0
    %v209 = vadd.f32 %v139, %v208
    %v210 = vpop.f32.mrb[0].mxu0
    %211 = vdwg.mxu0
    %212 = vmatprep.subr.mxu0 %v54
    %213 = vmatpush1.xpose.msra.mxu0 %v53
    %214 = vmatprep.subr.mxu0 %v62
    %215 = vmatpush1.xpose.msra.mxu0 %v61
    %216 = vmatprep.subr.mxu0 0.0
    %217 = vmatpush1.xpose.msra.mxu0 0.0
    %218 = vmatprep.subr.mxu0 0.0
    %219 = vmatpush1.xpose.msra.mxu0 0.0
    %220 = vmatprep.subr.mxu0 0.0
    %221 = vmatpush1.xpose.msra.mxu0 0.0
    %222 = vmatprep.subr.mxu0 0.0
    %223 = vmatpush1.xpose.msra.mxu0 0.0
    %224 = vmatprep.subr.mxu0 0.0
    %225 = vmatpush1.xpose.msra.mxu0 0.0
    %226 = vmatprep.subr.mxu0 0.0
    %227 = vmatpush1.xpose.msra.mxu0 0.0
    %228 = vmatprep.subr.mxu0 0.0
    %229 = vmatpush1.xpose.msra.mxu0 0.0
    %230 = vmatprep.subr.mxu0 0.0
    %231 = vmatpush1.xpose.msra.mxu0 0.0
    %232 = vmatprep.subr.mxu0 0.0
    %233 = vmatpush1.xpose.msra.mxu0 0.0
    %234 = vmatprep.subr.mxu0 0.0
    %235 = vmatpush1.xpose.msra.mxu0 0.0
    %236 = vmatprep.subr.mxu0 0.0
    %237 = vmatpush1.xpose.msra.mxu0 0.0
    %238 = vmatprep.subr.mxu0 0.0
    %239 = vmatpush1.xpose.msra.mxu0 0.0
    %240 = vmatprep.subr.mxu0 0.0
    %241 = vmatpush1.xpose.msra.mxu0 0.0
    %242 = vmatprep.subr.mxu0 0.0
    %243 = vmatpush1.xpose.msra.mxu0 0.0
    %244 = vmatprep.subr.mxu0 0.0
    %245 = vmatpush1.xpose.msra.mxu0 0.0
    %246 = vmatprep.subr.mxu0 0.0
    %247 = vmatpush1.xpose.msra.mxu0 0.0
    %248 = vmatprep.subr.mxu0 0.0
    %249 = vmatpush1.xpose.msra.mxu0 0.0
    %250 = vmatprep.subr.mxu0 0.0
    %251 = vmatpush1.xpose.msra.mxu0 0.0
    %252 = vmatprep.subr.mxu0 0.0
    %253 = vmatpush1.xpose.msra.mxu0 0.0
    %254 = vmatprep.subr.mxu0 0.0
    %255 = vmatpush1.xpose.msra.mxu0 0.0
    %256 = vmatprep.subr.mxu0 0.0
    %257 = vmatpush1.xpose.msra.mxu0 0.0
    %258 = vmatprep.subr.mxu0 0.0
    %259 = vmatpush1.xpose.msra.mxu0 0.0
    %260 = vmatprep.subr.mxu0 0.0
    %261 = vmatpush1.xpose.msra.mxu0 0.0
    %262 = vmatprep.subr.mxu0 0.0
    %263 = vmatpush1.xpose.msra.mxu0 0.0
    %264 = vmatprep.subr.mxu0 0.0
    %265 = vmatpush1.xpose.msra.mxu0 0.0
    %266 = vmatprep.subr.mxu0 0.0
    %267 = vmatpush1.xpose.msra.mxu0 0.0
    %268 = vmatprep.subr.mxu0 0.0
    %269 = vmatpush1.xpose.msra.mxu0 0.0
    %270 = vmatprep.subr.mxu0 0.0
    %271 = vmatpush1.xpose.msra.mxu0 0.0
    %272 = vmatprep.subr.mxu0 0.0
    %273 = vmatpush1.xpose.msra.mxu0 0.0
    %274 = vmatprep.subr.mxu0 0.0
    %275 = vmatpush1.xpose.msra.mxu0 0.0
    %276 = vmatprep.mubr.f32.mxu0 %v46
    %277 = vmatmul.mubr.f32.gmra.mrb[0].mxu0 %v45
    %v278 = vpop.f32.mrb[0].mxu0
    %v279 = vadd.f32 %v209, %v278
    %v280 = vpop.f32.mrb[0].mxu0
    %281 = vdwg.mxu0
    %282 = vmatprep.subr.mxu0 %v56
    %283 = vmatpush1.xpose.msra.mxu0 %v55
    %284 = vmatprep.subr.mxu0 %v64
    %285 = vmatpush1.xpose.msra.mxu0 %v63
    %286 = vmatprep.subr.mxu0 0.0
    %287 = vmatpush1.xpose.msra.mxu0 0.0
    %288 = vmatprep.subr.mxu0 0.0
    %289 = vmatpush1.xpose.msra.mxu0 0.0
    %290 = vmatprep.subr.mxu0 0.0
    %291 = vmatpush1.xpose.msra.mxu0 0.0
    %292 = vmatprep.subr.mxu0 0.0
    %293 = vmatpush1.xpose.msra.mxu0 0.0
    %294 = vmatprep.subr.mxu0 0.0
    %295 = vmatpush1.xpose.msra.mxu0 0.0
    %296 = vmatprep.subr.mxu0 0.0
    %297 = vmatpush1.xpose.msra.mxu0 0.0
    %298 = vmatprep.subr.mxu0 0.0
    %299 = vmatpush1.xpose.msra.mxu0 0.0
    %300 = vmatprep.subr.mxu0 0.0
    %301 = vmatpush1.xpose.msra.mxu0 0.0
    %302 = vmatprep.subr.mxu0 0.0
    %303 = vmatpush1.xpose.msra.mxu0 0.0
    %304 = vmatprep.subr.mxu0 0.0
    %305 = vmatpush1.xpose.msra.mxu0 0.0
    %306 = vmatprep.subr.mxu0 0.0
    %307 = vmatpush1.xpose.msra.mxu0 0.0
    %308 = vmatprep.subr.mxu0 0.0
    %309 = vmatpush1.xpose.msra.mxu0 0.0
    %310 = vmatprep.subr.mxu0 0.0
    %311 = vmatpush1.xpose.msra.mxu0 0.0
    %312 = vmatprep.subr.mxu0 0.0
    %313 = vmatpush1.xpose.msra.mxu0 0.0
    %314 = vmatprep.subr.mxu0 0.0
    %315 = vmatpush1.xpose.msra.mxu0 0.0
    %316 = vmatprep.subr.mxu0 0.0
    %317 = vmatpush1.xpose.msra.mxu0 0.0
    %318 = vmatprep.subr.mxu0 0.0
    %319 = vmatpush1.xpose.msra.mxu0 0.0
    %320 = vmatprep.subr.mxu0 0.0
    %321 = vmatpush1.xpose.msra.mxu0 0.0
    %322 = vmatprep.subr.mxu0 0.0
    %323 = vmatpush1.xpose.msra.mxu0 0.0
    %324 = vmatprep.subr.mxu0 0.0
    %325 = vmatpush1.xpose.msra.mxu0 0.0
    %326 = vmatprep.subr.mxu0 0.0
    %327 = vmatpush1.xpose.msra.mxu0 0.0
    %328 = vmatprep.subr.mxu0 0.0
    %329 = vmatpush1.xpose.msra.mxu0 0.0
    %330 = vmatprep.subr.mxu0 0.0
    %331 = vmatpush1.xpose.msra.mxu0 0.0
    %332 = vmatprep.subr.mxu0 0.0
    %333 = vmatpush1.xpose.msra.mxu0 0.0
    %334 = vmatprep.subr.mxu0 0.0
    %335 = vmatpush1.xpose.msra.mxu0 0.0
    %336 = vmatprep.subr.mxu0 0.0
    %337 = vmatpush1.xpose.msra.mxu0 0.0
    %338 = vmatprep.subr.mxu0 0.0
    %339 = vmatpush1.xpose.msra.mxu0 0.0
    %340 = vmatprep.subr.mxu0 0.0
    %341 = vmatpush1.xpose.msra.mxu0 0.0
    %342 = vmatprep.subr.mxu0 0.0
    %343 = vmatpush1.xpose.msra.mxu0 0.0
    %344 = vmatprep.subr.mxu0 0.0
    %345 = vmatpush1.xpose.msra.mxu0 0.0
    %346 = vmatprep.mubr.f32.mxu0 %v48
    %347 = vmatmul.mubr.f32.gmra.mrb[0].mxu0 %v47
    %v348 = vpop.f32.mrb[0].mxu0
    %v349 = vadd.f32 %v279, %v348
    %v350 = vpop.f32.mrb[0].mxu0
    %351 = vdwg.mxu0
    %vm352 = vcmask 80896
    %353 = vst.msk [vmem:[#allocation7] sm:$0xff] %vm352, %v349
    // Predicated region
    $region22: #{tpu_custom_call.1} parent=1 // pred_check
      _
    $region23: #{tpu_custom_call.1} parent=1 // pred_check_branch
      %355 = sbr.rel (0) target = $region25
    $region24: #{tpu_custom_call.1} parent=1 // pred_region
      %s357 = ssub.s32 128, 128
      %358 = vsyncadd [#allocation4], %s357
      %s360 = sshll.u32 [#allocation7], 4
      %s361 = int_to_ptr.vmem [resolvable:$true] %s360
      %363 = dma.vmem_to_hbm [thread:$0]  %s361, 128, %s3, [#allocation4]
    $region25: #{tpu_custom_call.1} parent=1 // pred_fallthru
      _
    // Predicated region
    $region26: #{tpu_custom_call.1} parent=1 // pred_check
      _
    $region27: #{tpu_custom_call.1} parent=1 // pred_check_branch
      %365 = sbr.rel (0) target = $region29
    $region28: #{tpu_custom_call.1} parent=1 // pred_region
      %366 = dma.done [#allocation4], 128
    $region29: #{tpu_custom_call.1} parent=1 // pred_fallthru
      _
    %367 = vsyncpa [#allocation3], 1
    %368 = vsyncpa [#allocation6], 1
    %369 = vsyncpa [#allocation4], 1

</llo_original>
